<compile_context>
chip_gen: v7x
topology: tpu7x:2x2x1
jax: 0.10.0
libtpu: 0.0.40
codegen_flags: <defaults>
</compile_context>

<pallas_src>
import functools

import jax
import jax.numpy as jnp
from jax import lax
from jax.experimental import pallas as pl
from jax.experimental.pallas import tpu as pltpu


_SUB = 16  # row-tile multiple: safe for f32 (8) and bf16 (16) sublane packing


def _round_up(x, m):
    return ((x + m - 1) // m) * m


def _pick_rows_tile(rows, rows_tile):
    """Clamp the row tile to the problem and keep >=2 grid steps when possible
    (dimension_semantics=("parallel",) shards the grid across v7x's 2 TCs)."""
    rt = min(rows_tile, _round_up(rows, _SUB))
    rt = min(rt, max(_SUB, _round_up(pl.cdiv(rows, 2), _SUB)))
    return max(rt, _SUB)


def _vmem_limit_bytes(rows_tile, d_in, d_out, x_dtype, out_dtype, w_dtype):
    # double-buffered x / out tiles + resident pre-cast W + biases + headroom
    xb = jnp.dtype(x_dtype).itemsize
    ob = jnp.dtype(out_dtype).itemsize
    wb = jnp.dtype(w_dtype).itemsize
    need = (2 * rows_tile * d_in * xb
            + 2 * rows_tile * d_out * ob
            + d_in * d_out * wb
            + 4 * d_out * 4
            + (2 << 20))
    try:
        cap = int(0.75 * pltpu.get_tpu_info().vmem_capacity_bytes)
    except Exception:
        cap = 48 << 20  # conservative fallback, fits every generation (v7x: 64 MiB)
    return int(min(max(need, 16 << 20), cap))


# --------------------- fused LayerNorm + Linear kernel ------------------------

def _prenorm_linear_kernel(x_ref, w_ref, b_ref, o_ref, *, eps, mxu_dtype):
    # x_ref: (tm, d_in) row tile; w_ref: (d_in, d_out) pre-cast, resident;
    # b_ref: (1, d_out) f32 (already includes beta @ W + linear bias).
    x = x_ref[...].astype(jnp.float32)
    mean = jnp.mean(x, axis=-1, keepdims=True)
    c = x - mean
    var = jnp.mean(c * c, axis=-1, keepdims=True)
    y = c * lax.rsqrt(var + eps)                       # gamma/beta folded into W/b
    acc = jnp.dot(y.astype(mxu_dtype), w_ref[...],
                  preferred_element_type=jnp.float32)  # MXU, f32 accumulate
    o_ref[...] = (acc + b_ref[...]).astype(o_ref.dtype)


def pre_norm_linear(x, gamma, beta, w, wb, *, eps=1e-5, rows_tile=512,
                    mxu_dtype=jnp.bfloat16, out_dtype=None):
    """Fused PreNorm(dim, Linear(d_in, d_out)): Linear(LayerNorm(x))."""
    orig_shape = x.shape
    d_in = orig_shape[-1]
    d_out = w.shape[-1]
    out_dtype = x.dtype if out_dtype is None else out_dtype

    x2 = x.reshape(-1, d_in)
    rows = x2.shape[0]
    rt = _pick_rows_tile(rows, rows_tile)
    grid = pl.cdiv(rows, rt)  # ragged tail block handled by Pallas masking

    # Fold the LayerNorm affine into the Linear (done in f32, once).
    # TODO(synk): in a real model cache w_fold/b_fold across forward calls.
    w32 = w.astype(jnp.float32)
    w_fold = (gamma.astype(jnp.float32)[:, None] * w32).astype(mxu_dtype)
    b_fold = (beta.astype(jnp.float32) @ w32
              + wb.astype(jnp.float32)).reshape(1, d_out)

    # NOTE: for much larger d_in/d_out add a K (and/or N) grid axis with a VMEM
    # f32 accumulator; keep K/N tiles >= 256 on v6e/v7x (256-wide MXU).
    out = pl.pallas_call(
        functools.partial(_prenorm_linear_kernel, eps=eps, mxu_dtype=mxu_dtype),
        out_shape=jax.ShapeDtypeStruct((rows, d_out), out_dtype),
        grid_spec=pltpu.PrefetchScalarGridSpec(
            num_scalar_prefetch=0,
            grid=(grid,),
            in_specs=[
                pl.BlockSpec((rt, d_in), lambda i: (i, 0)),
                # Constant index_maps -> DMA'd once, resident across row tiles.
                pl.BlockSpec((d_in, d_out), lambda i: (0, 0)),
                pl.BlockSpec((1, d_out), lambda i: (0, 0)),
            ],
            out_specs=pl.BlockSpec((rt, d_out), lambda i: (i, 0)),
        ),
        compiler_params=pltpu.CompilerParams(
            dimension_semantics=("parallel",),
            vmem_limit_bytes=_vmem_limit_bytes(rt, d_in, d_out,
                                               x.dtype, out_dtype, mxu_dtype),
        ),
    )(x2, w_fold, b_fold)

    return out.reshape(orig_shape[:-1] + (d_out,))


# ----------------- standalone LayerNorm kernel (generic fn) -------------------

def _layernorm_kernel(x_ref, g_ref, b_ref, o_ref, *, eps):
    x = x_ref[...].astype(jnp.float32)
    mean = jnp.mean(x, axis=-1, keepdims=True)
    c = x - mean
    var = jnp.mean(c * c, axis=-1, keepdims=True)
    y = c * lax.rsqrt(var + eps) * g_ref[...] + b_ref[...]
    o_ref[...] = y.astype(o_ref.dtype)


def layernorm_pallas(x, gamma, beta, *, eps=1e-5, rows_tile=512, out_dtype=None):
    """LayerNorm over the last axis of x (any leading dims)."""
    orig_shape = x.shape
    d = orig_shape[-1]
    out_dtype = x.dtype if out_dtype is None else out_dtype

    x2 = x.reshape(-1, d)
    rows = x2.shape[0]
    rt = _pick_rows_tile(rows, rows_tile)
    grid = pl.cdiv(rows, rt)

    g2 = gamma.astype(jnp.float32).reshape(1, d)
    b2 = beta.astype(jnp.float32).reshape(1, d)

    out = pl.pallas_call(
        functools.partial(_layernorm_kernel, eps=eps),
        out_shape=jax.ShapeDtypeStruct((rows, d), out_dtype),
        grid_spec=pltpu.PrefetchScalarGridSpec(
            num_scalar_prefetch=0,
            grid=(grid,),
            in_specs=[
                pl.BlockSpec((rt, d), lambda i: (i, 0)),
                pl.BlockSpec((1, d), lambda i: (0, 0)),
                pl.BlockSpec((1, d), lambda i: (0, 0)),
            ],
            out_specs=pl.BlockSpec((rt, d), lambda i: (i, 0)),
        ),
        compiler_params=pltpu.CompilerParams(
            dimension_semantics=("parallel",),
            vmem_limit_bytes=_vmem_limit_bytes(rt, d, d, x.dtype, out_dtype,
                                               jnp.float32),
        ),
    )(x2, g2, b2)

    return out.reshape(orig_shape[:-1] + (d,))


def pre_norm(x, ln_gamma, ln_beta, fn, *args, **kwargs):
    """Generic PreNorm.forward: fn(LayerNorm(x), *args, **kwargs)."""
    # TODO(synk): arbitrary nn.Module `fn` can't be fused generically; only the
    # LayerNorm runs as a Pallas kernel here (use pre_norm_linear when fn is Linear).
    return fn(layernorm_pallas(x, ln_gamma, ln_beta), *args, **kwargs)


# ----------------------------------- main --------------------------------------

if __name__ == "__main__":
    # Lane-dense trailing dim; rows = 400 -> rows_tile 208 -> grid of 2
    # (exercises the ragged tail block AND the multi-step parallel grid).
    B, N, D = 2, 200, 128

    key = jax.random.PRNGKey(0)
    k_x, k_g, k_b, k_w, k_wb = jax.random.split(key, 5)

    x = jax.random.normal(k_x, (B, N, D), dtype=jnp.float32)
    ln_gamma = 1.0 + 0.1 * jax.random.normal(k_g, (D,), dtype=jnp.float32)
    ln_beta = 0.1 * jax.random.normal(k_b, (D,), dtype=jnp.float32)

    # `fn` instantiated as Linear(D, D) with deterministic params.
    w = jax.random.normal(k_w, (D, D), dtype=jnp.float32) / jnp.sqrt(D)
    wb = 0.01 * jax.random.normal(k_wb, (D,), dtype=jnp.float32)

    def reference(xf):
        mean = jnp.mean(xf, axis=-1, keepdims=True)
        var = jnp.mean((xf - mean) ** 2, axis=-1, keepdims=True)
        x_n = (xf - mean) / jnp.sqrt(var + 1e-5) * ln_gamma + ln_beta
        return x_n @ w + wb

    ref = reference(x)

    # 1) Fused PreNorm+Linear, f32 everywhere (tight-tolerance correctness path;
    #    gamma/beta folding changes association order -> ~1e-6 level deltas).
    out_f32 = jax.block_until_ready(
        pre_norm_linear(x, ln_gamma, ln_beta, w, wb,
                        mxu_dtype=jnp.float32, out_dtype=jnp.float32))
    assert out_f32.shape == ref.shape
    assert jnp.allclose(out_f32, ref, atol=1e-3, rtol=1e-3), "fused f32 mismatch"

    # 2) bf16 activations over HBM + bf16 MXU inputs (fast path on all gens),
    #    f32 LayerNorm math and f32 matmul accumulation in-kernel.
    x_bf = x.astype(jnp.bfloat16)
    ref_bf = reference(x_bf.astype(jnp.float32))
    out_bf = jax.block_until_ready(
        pre_norm_linear(x_bf, ln_gamma, ln_beta, w, wb,
                        mxu_dtype=jnp.bfloat16, out_dtype=jnp.bfloat16))
    assert jnp.allclose(out_bf.astype(jnp.float32), ref_bf,
                        atol=5e-2, rtol=5e-2), "fused bf16 mismatch"

    # 3) Generic PreNorm(fn) path (standalone LN kernel + arbitrary fn).
    out_gen = jax.block_until_ready(
        pre_norm(x, ln_gamma, ln_beta, lambda t: t @ w + wb))
    assert jnp.allclose(out_gen, ref, atol=1e-4, rtol=1e-4), "generic path mismatch"

    print("KERNEL_OK")
</pallas_src>

<mosaic_0001>
module attributes {stable_mosaic.version = 11 : i64} {
  func.func @_prenorm_linear_kernel(%arg0: i32, %arg1: memref<208x128xf32, #tpu.memory_space<vmem>>, %arg2: memref<128x128xf32, #tpu.memory_space<vmem>>, %arg3: memref<1x128xf32, #tpu.memory_space<vmem>>, %arg4: memref<208x128xf32, #tpu.memory_space<vmem>>) attributes {dimension_semantics = [#tpu.dimension_semantics<parallel>], iteration_bounds = array<i64: 2>, scalar_prefetch = 0 : i64, scratch_operands = 0 : i64, tpu.core_type = #tpu.core_type<tc>, window_params = [{transform_indices = @transform_0, window_bounds = array<i64: 208, 128>}, {pipeline_mode = #tpu.pipeline_mode<synchronous>, transform_indices = @transform_1, window_bounds = array<i64: 128, 128>}, {pipeline_mode = #tpu.pipeline_mode<synchronous>, transform_indices = @transform_2, window_bounds = array<i64: 1, 128>}, {transform_indices = @transform_3, window_bounds = array<i64: 208, 128>}]} {
    %c0 = arith.constant 0 : index
    %c0_0 = arith.constant 0 : index
    %0 = vector.load %arg1[%c0, %c0_0] : memref<208x128xf32, #tpu.memory_space<vmem>>, vector<208x128xf32>
    %cst = arith.constant dense<0.000000e+00> : vector<208xf32>
    %1 = vector.multi_reduction <add>, %0, %cst [1] : vector<208x128xf32> to vector<208xf32>
    %2 = vector.shape_cast %1 : vector<208xf32> to vector<208x1xf32>
    %cst_1 = arith.constant 1.280000e+02 : f32
    %3 = vector.broadcast %cst_1 : f32 to vector<208x1xf32>
    %4 = arith.divf %2, %3 : vector<208x1xf32>
    %5 = vector.broadcast %4 : vector<208x1xf32> to vector<208x128xf32>
    %6 = arith.subf %0, %5 : vector<208x128xf32>
    %7 = arith.mulf %6, %6 : vector<208x128xf32>
    %cst_2 = arith.constant dense<0.000000e+00> : vector<208xf32>
    %8 = vector.multi_reduction <add>, %7, %cst_2 [1] : vector<208x128xf32> to vector<208xf32>
    %9 = vector.shape_cast %8 : vector<208xf32> to vector<208x1xf32>
    %cst_3 = arith.constant 1.280000e+02 : f32
    %10 = vector.broadcast %cst_3 : f32 to vector<208x1xf32>
    %11 = arith.divf %9, %10 : vector<208x1xf32>
    %cst_4 = arith.constant 9.99999974E-6 : f32
    %12 = vector.broadcast %cst_4 : f32 to vector<208x1xf32>
    %13 = arith.addf %11, %12 : vector<208x1xf32>
    %14 = math.rsqrt %13 : vector<208x1xf32>
    %15 = vector.broadcast %14 : vector<208x1xf32> to vector<208x128xf32>
    %16 = arith.mulf %6, %15 : vector<208x128xf32>
    %c0_5 = arith.constant 0 : index
    %c0_6 = arith.constant 0 : index
    %17 = vector.load %arg2[%c0_5, %c0_6] : memref<128x128xf32, #tpu.memory_space<vmem>>, vector<128x128xf32>
    %cst_7 = arith.constant dense<0.000000e+00> : vector<208x128xf32>
    %18 = tpu.matmul %16, %17, %cst_7 {dimension_numbers = #tpu.dot_dimension_numbers<[1], [0], [0], [1], [0, 0, 1, 1], [], []>} : vector<208x128xf32>, vector<128x128xf32>, vector<208x128xf32> -> vector<208x128xf32>
    %c0_8 = arith.constant 0 : index
    %c0_9 = arith.constant 0 : index
    %19 = vector.load %arg3[%c0_8, %c0_9] : memref<1x128xf32, #tpu.memory_space<vmem>>, vector<1x128xf32>
    %20 = vector.broadcast %19 : vector<1x128xf32> to vector<208x128xf32>
    %21 = arith.addf %18, %20 : vector<208x128xf32>
    %c0_10 = arith.constant 0 : index
    %c0_11 = arith.constant 0 : index
    %22 = vector.load %arg4[%c0_10, %c0_11] : memref<208x128xf32, #tpu.memory_space<vmem>>, vector<208x128xf32>
    tpu.vector_store %arg4[%c0_10, %c0_11], %21 {strides = array<i32>} : memref<208x128xf32, #tpu.memory_space<vmem>>, vector<208x128xf32>,
    return
  }
  func.func @transform_0(%arg0: i32) -> (i32, i32) {
    %c0_i32 = arith.constant 0 : i32
    %c0_i32_0 = arith.constant 0 : i32
    return %arg0, %c0_i32 : i32, i32
  }
  func.func @transform_1(%arg0: i32) -> (i32, i32) {
    %c0_i32 = arith.constant 0 : i32
    %c0_i32_0 = arith.constant 0 : i32
    %c0_i32_1 = arith.constant 0 : i32
    return %c0_i32, %c0_i32_0 : i32, i32
  }
  func.func @transform_2(%arg0: i32) -> (i32, i32) {
    %c0_i32 = arith.constant 0 : i32
    %c0_i32_0 = arith.constant 0 : i32
    %c0_i32_1 = arith.constant 0 : i32
    return %c0_i32, %c0_i32_0 : i32, i32
  }
  func.func @transform_3(%arg0: i32) -> (i32, i32) {
    %c0_i32 = arith.constant 0 : i32
    %c0_i32_0 = arith.constant 0 : i32
    return %arg0, %c0_i32 : i32, i32
  }
}

</mosaic_0001>

<llo_original>
// kernel: tpu_custom_call.1
$region0: #{tpu_custom_call.1}
  #allocation0 [shape = 'u32[]', space=smem, size = 0x4, offset = 0x4, fixed_abs, tag = 'smem constant byte address 0x4 - core index']
  #allocation1 [shape = 'u32[144,128]{1,0:T(1,128)}', space=vmem, size = 0x12000, scoped, tag = 'internal scratch']
  %s0 = inlined_call_operand.hbm [shape: f32[400,128], index: 0, kind: input, shape index: {}]
  %s1 = inlined_call_operand.hbm [shape: f32[128,128], index: 1, kind: input, shape index: {}]
  %s2 = inlined_call_operand.vmem [shape: f32[1,128], index: 2, kind: input, shape index: {}]
  %s3 = inlined_call_operand.hbm [shape: f32[400,128], index: 3, kind: output, shape index: {}]
  %s4 = sld [smem:[#allocation0]]
  $region53: #{tpu_custom_call.1} parent=0
    _
  %s6 = ssub.s32 1, %s4
  %s7 = scalar_select 0, %s6, %s4
  $region1: #{tpu_custom_call.1} parent=0
    #allocation2 [shape = 'u8[212992]{0}', space=vmem, size = 0x34000, scoped, tag = 'input window, operand 0']
    #allocation3 [shape = 's32[2]{0}', space=sflag, size = 0x8, scoped, tag = 'scoped memory for tpu_custom_call.1']
    #allocation4 [shape = 's32[2]{0}', space=sflag, size = 0x8, scoped, tag = 'scoped memory for tpu_custom_call.1']
    #allocation5 [shape = 'u8[65536]{0}', space=vmem, size = 0x10000, scoped, tag = 'input window, operand 1, single buffered']
    #allocation6 [shape = 's32[1]{0}', space=sflag, size = 0x4, scoped, tag = 'scoped memory for tpu_custom_call.1']
    #allocation7 [shape = 'u8[212992]{0}', space=vmem, size = 0x34000, scoped, tag = 'output window, operand 0']
    %8 = vsyncpa [#allocation3], 0
    %s9 = scalar_lea.sflag [#allocation3], 1
    %10 = vsyncpa %s9, 0
    %11 = vsyncpa [#allocation6], 0
    %12 = vsyncpa [#allocation4], 0
    %s13 = scalar_lea.sflag [#allocation4], 1
    %14 = vsyncpa %s13, 0
    loop: start=0, step=1, limit=4
    $region2: #{tpu_custom_call.1} parent=1 // loop_pre_header
      _
    $region3: #{tpu_custom_call.1} parent=1 // loop_header
      %s16 = sphi 0, %s20
      %p17 = scmp.ge.s32.totalorder %s16, 4
      %s26 = sphi 0, %s28
      %s29 = sphi 0, %s26
      %s30 = sphi 0, %s29
      %s46 = sphi 0, %s30
      %s50 = sphi 0, %s50
      %s52 = sphi 0, %s50
      %s53 = sphi 0, %s52
      %s67 = sphi 0, %s53
      %s71 = sphi 0, %s71
      %s73 = sphi 0, %s71
      %s74 = sphi 0, %s73
      %s88 = sphi 0, %s74
      %s94 = sphi 0, %s96
      %s97 = sphi 0, %s94
      %s98 = sphi 0, %s97
      %s114 = sphi 0, %s98
    $region4: #{tpu_custom_call.1} parent=1 // loop_header_branch
      %19 = sbr.rel (%p17) target = $region8
    $region5: #{tpu_custom_call.1} parent=1 // loop_body
      %s21 = ssub.s32 %s16, 1
      %s22 = ssub.s32 %s16, 2
      %s23 = sadd.s32 %s16, 1
      %s24 = ssub.s32 %s16, %s23
      %p25 = scmp.eq.s32.totalorder %s24, 0
      %s27 = sadd.s32 %s26, 1
      %s28 = scalar_select %p25, %s26, %s27
      %p31 = pneg %p25
      %p32 = scmp.eq.s32.totalorder %s16, 1
      %p33 = por %p31, %p32
      %p34 = scmp.ne.s32.totalorder %s26, %s29
      %p35 = scmp.eq.s32.totalorder %s16, 0
      %p36 = por %p34, %p35
      %p37 = scmp.ne.s32.totalorder %s26, %s29
      %p38 = scmp.eq.s32.totalorder %s21, 1
      %p39 = por %p37, %p38
      %p40 = scmp.ne.s32.totalorder %s29, %s30
      %p41 = scmp.eq.s32.totalorder %s21, 0
      %p42 = por %p40, %p41
      %p43 = scmp.ne.s32.totalorder %s29, %s30
      %p44 = scmp.eq.s32.totalorder %s22, 1
      %p45 = por %p43, %p44
      %p47 = scmp.ne.s32.totalorder %s30, %s46
      %p48 = scmp.eq.s32.totalorder %s22, 0
      %p49 = por %p47, %p48
      %s51 = sadd.s32 %s50, 1
      %p54 = scmp.eq.s32.totalorder %s16, 1
      %p55 = scmp.ne.s32.totalorder %s50, %s52
      %p56 = scmp.eq.s32.totalorder %s16, 0
      %p57 = por %p55, %p56
      %p58 = scmp.ne.s32.totalorder %s50, %s52
      %p59 = scmp.eq.s32.totalorder %s21, 1
      %p60 = por %p58, %p59
      %p61 = scmp.ne.s32.totalorder %s52, %s53
      %p62 = scmp.eq.s32.totalorder %s21, 0
      %p63 = por %p61, %p62
      %p64 = scmp.ne.s32.totalorder %s52, %s53
      %p65 = scmp.eq.s32.totalorder %s22, 1
      %p66 = por %p64, %p65
      %p68 = scmp.ne.s32.totalorder %s53, %s67
      %p69 = scmp.eq.s32.totalorder %s22, 0
      %p70 = por %p68, %p69
      %s72 = sadd.s32 %s71, 1
      %p75 = scmp.eq.s32.totalorder %s16, 1
      %p76 = scmp.ne.s32.totalorder %s71, %s73
      %p77 = scmp.eq.s32.totalorder %s16, 0
      %p78 = por %p76, %p77
      %p79 = scmp.ne.s32.totalorder %s71, %s73
      %p80 = scmp.eq.s32.totalorder %s21, 1
      %p81 = por %p79, %p80
      %p82 = scmp.ne.s32.totalorder %s73, %s74
      %p83 = scmp.eq.s32.totalorder %s21, 0
      %p84 = por %p82, %p83
      %p85 = scmp.ne.s32.totalorder %s73, %s74
      %p86 = scmp.eq.s32.totalorder %s22, 1
      %p87 = por %p85, %p86
      %p89 = scmp.ne.s32.totalorder %s74, %s88
      %p90 = scmp.eq.s32.totalorder %s22, 0
      %p91 = por %p89, %p90
      %s92 = ssub.s32 %s16, %s23
      %p93 = scmp.eq.s32.totalorder %s92, 0
      %s95 = sadd.s32 %s94, 1
      %s96 = scalar_select %p93, %s94, %s95
      %p99 = pneg %p93
      %p100 = scmp.eq.s32.totalorder %s16, 1
      %p101 = por %p99, %p100
      %p102 = scmp.ne.s32.totalorder %s94, %s97
      %p103 = scmp.eq.s32.totalorder %s16, 0
      %p104 = por %p102, %p103
      %p105 = scmp.ne.s32.totalorder %s94, %s97
      %p106 = scmp.eq.s32.totalorder %s21, 1
      %p107 = por %p105, %p106
      %p108 = scmp.ne.s32.totalorder %s97, %s98
      %p109 = scmp.eq.s32.totalorder %s21, 0
      %p110 = por %p108, %p109
      %p111 = scmp.ne.s32.totalorder %s97, %s98
      %p112 = scmp.eq.s32.totalorder %s22, 1
      %p113 = por %p111, %p112
      %p115 = scmp.ne.s32.totalorder %s98, %s114
      %p116 = scmp.eq.s32.totalorder %s22, 0
      %p117 = por %p115, %p116
      %p118 = scmp.le.s32.totalorder 1, %s16
      %p119 = scmp.lt.s32.totalorder %s16, 3
      %p120 = pnand %p118, %p119
      %p121 = pneg %p120
      // Predicated region
      $region9: #{tpu_custom_call.1} parent=5 // pred_check
        _
      $region10: #{tpu_custom_call.1} parent=5 // pred_check_branch
        %123 = sbr.rel (%p120) target = $region12
      $region11: #{tpu_custom_call.1} parent=5 // pred_region
        %s124 = ssub.s32 %s16, 1
        // Predicated region
        $region13: #{tpu_custom_call.1} parent=11 // pred_check
          %p125 = pneg %p63
        $region14: #{tpu_custom_call.1} parent=11 // pred_check_branch
          %127 = sbr.rel (%p125) target = $region16
        $region15: #{tpu_custom_call.1} parent=11 // pred_region
          %s129 = ssub.s32 2048, 2048
          %130 = vsyncadd [#allocation6], %s129
          %s131 = sshll.u32 [#allocation5], 4
          %s132 = int_to_ptr.vmem [resolvable:$true] %s131
          %137 = dma.hbm_to_vmem [thread:$0]  %s1, 2048, %s132, [#allocation6], 128, 128, 8
        $region16: #{tpu_custom_call.1} parent=11 // pred_fallthru
          _
        // Predicated region
        $region17: #{tpu_custom_call.1} parent=11 // pred_check
          %p138 = pneg %p84
        $region18: #{tpu_custom_call.1} parent=11 // pred_check_branch
          %140 = sbr.rel (%p138) target = $region20
        $region19: #{tpu_custom_call.1} parent=11 // pred_region
          _
        $region20: #{tpu_custom_call.1} parent=11 // pred_fallthru
          _
      $region12: #{tpu_custom_call.1} parent=5 // pred_fallthru
        _
      %p141 = scmp.lt.s32.totalorder %s16, 2
      // Predicated region
      $region21: #{tpu_custom_call.1} parent=5 // pred_check
        %p142 = pneg %p141
      $region22: #{tpu_custom_call.1} parent=5 // pred_check_branch
        %144 = sbr.rel (%p142) target = $region24
      $region23: #{tpu_custom_call.1} parent=5 // pred_region
        // Predicated region
        $region25: #{tpu_custom_call.1} parent=23 // pred_check
          %p145 = pneg %p36
        $region26: #{tpu_custom_call.1} parent=23 // pred_check_branch
          %147 = sbr.rel (%p145) target = $region28
        $region27: #{tpu_custom_call.1} parent=23 // pred_region
          %s148 = sand.u32 %s26, 1
          %s149 = scalar_lea.sflag [#allocation3], %s148
          %s150 = sand.u32 %s26, 1
          %s151 = smul.addr %s150, 208
          %s152 = scalar_lea.vmem [#allocation2], %s151
          %s153 = smul.u32 26, %s16
          %s154 = ssub.s32 50, %s153
          %p155 = scmp.lt.s32.totalorder %s154, 26
          %s156 = scalar_select %p155, %s154, 26
          %s157 = smul.u32 128, %s156
          %s159 = ssub.s32 3328, %s157
          %160 = vsyncadd %s149, %s159
          %p161 = scmp.ne.s32.totalorder 0, %s157
          %s162 = smul.addr %s153, 128
          %s163 = scalar_lea.hbm %s0, %s162
          %s164 = smul.u32 8, %s156
          %s165 = sshll.u32 %s152, 4
          %s166 = int_to_ptr.vmem [resolvable:$true] %s165
          %s167 = sshll.u32 %s164, 4
          %171 = dma.hbm_to_vmem [thread:$0]  (%p161), %s163, %s167, %s166, %s149, 128, 128, 8
        $region28: #{tpu_custom_call.1} parent=23 // pred_fallthru
          _
      $region24: #{tpu_custom_call.1} parent=5 // pred_fallthru
        _
      %p172 = scmp.le.s32.totalorder 1, %s16
      %p173 = scmp.lt.s32.totalorder %s16, 3
      %p174 = pnand %p172, %p173
      %p175 = pneg %p174
      // Predicated region
      $region29: #{tpu_custom_call.1} parent=5 // pred_check
        _
      $region30: #{tpu_custom_call.1} parent=5 // pred_check_branch
        %177 = sbr.rel (%p174) target = $region32
      $region31: #{tpu_custom_call.1} parent=5 // pred_region
        %s178 = ssub.s32 %s16, 1
        %s179 = sand.u32 %s29, 1
        %s180 = scalar_lea.sflag [#allocation3], %s179
        %s181 = sand.u32 %s29, 1
        %s182 = smul.addr %s181, 208
        %s183 = scalar_lea.vmem [#allocation2], %s182
        // Predicated region
        $region33: #{tpu_custom_call.1} parent=31 // pred_check
          %p184 = pneg %p42
        $region34: #{tpu_custom_call.1} parent=31 // pred_check_branch
          %186 = sbr.rel (%p184) target = $region36
        $region35: #{tpu_custom_call.1} parent=31 // pred_region
          %187 = dma.done %s180, 3328
        $region36: #{tpu_custom_call.1} parent=31 // pred_fallthru
          _
        // Predicated region
        $region37: #{tpu_custom_call.1} parent=31 // pred_check
          %p188 = pneg %p63
        $region38: #{tpu_custom_call.1} parent=31 // pred_check_branch
          %190 = sbr.rel (%p188) target = $region40
        $region39: #{tpu_custom_call.1} parent=31 // pred_region
          %191 = dma.done [#allocation6], 2048
        $region40: #{tpu_custom_call.1} parent=31 // pred_fallthru
          _
        %s192 = sand.u32 %s29, 1
        %s193 = scalar_lea.sflag [#allocation3], %s192
        %s194 = sand.u32 %s29, 1
        %s195 = smul.addr %s194, 208
        %s196 = scalar_lea.vmem [#allocation2], %s195
        %p197 = pneg %p42
        %p198 = pneg %p39
        %p199 = pneg %p63
        %p200 = pneg %p60
        %p201 = pneg %p84
        %p202 = pneg %p81
        %p203 = pneg %p110
        %p204 = pneg %p107
        %s205 = sand.u32 %s97, 1
        %s206 = scalar_lea.sflag [#allocation4], %s205
        %s207 = sand.u32 %s97, 1
        %s208 = smul.addr %s207, 208
        %s209 = scalar_lea.vmem [#allocation7], %s208
        %s210 = smul.u32 26, %s21
        %s211 = ssub.s32 50, %s210
        %p212 = scmp.lt.s32.totalorder %s211, 26
        %s213 = scalar_select %p212, %s211, 26
        %s214 = smul.u32 128, %s213
        %s215 = smul.u32 26, %s21
        %s216 = ssub.s32 50, %s215
        %p217 = scmp.lt.s32.totalorder %s216, 26
        %s218 = scalar_select %p217, %s216, 26
        %s219 = smul.u32 128, %s218
        %v220 = vld [vmem:[%s183] sm:$0xff]
        %v221 = vld [vmem:[%s183 + $0x8] sm:$0xff]
        %v222 = vld [vmem:[%s183 + $0x10] sm:$0xff]
        %v223 = vld [vmem:[%s183 + $0x18] sm:$0xff]
        %v224 = vld [vmem:[%s183 + $0x20] sm:$0xff]
        %v225 = vld [vmem:[%s183 + $0x28] sm:$0xff]
        %v226 = vld [vmem:[%s183 + $0x30] sm:$0xff]
        %v227 = vld [vmem:[%s183 + $0x38] sm:$0xff]
        %v228 = vld [vmem:[%s183 + $0x40] sm:$0xff]
        %v229 = vld [vmem:[%s183 + $0x48] sm:$0xff]
        %v230 = vld [vmem:[%s183 + $0x50] sm:$0xff]
        %v231 = vld [vmem:[%s183 + $0x58] sm:$0xff]
        %v232 = vld [vmem:[%s183 + $0x60] sm:$0xff]
        %v233 = vld [vmem:[%s183 + $0x68] sm:$0xff]
        %v234 = vld [vmem:[%s183 + $0x70] sm:$0xff]
        %v235 = vld [vmem:[%s183 + $0x78] sm:$0xff]
        %v236 = vld [vmem:[%s183 + $0x80] sm:$0xff]
        %v237 = vld [vmem:[%s183 + $0x88] sm:$0xff]
        %v238 = vld [vmem:[%s183 + $0x90] sm:$0xff]
        %v239 = vld [vmem:[%s183 + $0x98] sm:$0xff]
        %v240 = vld [vmem:[%s183 + $0xa0] sm:$0xff]
        %v241 = vld [vmem:[%s183 + $0xa8] sm:$0xff]
        %v242 = vld [vmem:[%s183 + $0xb0] sm:$0xff]
        %v243 = vld [vmem:[%s183 + $0xb8] sm:$0xff]
        %v244 = vld [vmem:[%s183 + $0xc0] sm:$0xff]
        %v245 = vld [vmem:[%s183 + $0xc8] sm:$0xff]
        %246 = vadd.xlane.f32.xlu0 %v220
        %v247 = vpop.xlane.xlu0 %246
        %248 = vadd.xlane.f32.xlu0 %v221
        %v249 = vpop.xlane.xlu0 %248
        %250 = vadd.xlane.f32.xlu0 %v222
        %v251 = vpop.xlane.xlu0 %250
        %252 = vadd.xlane.f32.xlu0 %v223
        %v253 = vpop.xlane.xlu0 %252
        %254 = vadd.xlane.f32.xlu0 %v224
        %v255 = vpop.xlane.xlu0 %254
        %256 = vadd.xlane.f32.xlu0 %v225
        %v257 = vpop.xlane.xlu0 %256
        %258 = vadd.xlane.f32.xlu0 %v226
        %v259 = vpop.xlane.xlu0 %258
        %260 = vadd.xlane.f32.xlu0 %v227
        %v261 = vpop.xlane.xlu0 %260
        %262 = vadd.xlane.f32.xlu0 %v228
        %v263 = vpop.xlane.xlu0 %262
        %264 = vadd.xlane.f32.xlu0 %v229
        %v265 = vpop.xlane.xlu0 %264
        %266 = vadd.xlane.f32.xlu0 %v230
        %v267 = vpop.xlane.xlu0 %266
        %268 = vadd.xlane.f32.xlu0 %v231
        %v269 = vpop.xlane.xlu0 %268
        %270 = vadd.xlane.f32.xlu0 %v232
        %v271 = vpop.xlane.xlu0 %270
        %272 = vadd.xlane.f32.xlu0 %v233
        %v273 = vpop.xlane.xlu0 %272
        %274 = vadd.xlane.f32.xlu0 %v234
        %v275 = vpop.xlane.xlu0 %274
        %276 = vadd.xlane.f32.xlu0 %v235
        %v277 = vpop.xlane.xlu0 %276
        %278 = vadd.xlane.f32.xlu0 %v236
        %v279 = vpop.xlane.xlu0 %278
        %280 = vadd.xlane.f32.xlu0 %v237
        %v281 = vpop.xlane.xlu0 %280
        %282 = vadd.xlane.f32.xlu0 %v238
        %v283 = vpop.xlane.xlu0 %282
        %284 = vadd.xlane.f32.xlu0 %v239
        %v285 = vpop.xlane.xlu0 %284
        %286 = vadd.xlane.f32.xlu0 %v240
        %v287 = vpop.xlane.xlu0 %286
        %288 = vadd.xlane.f32.xlu0 %v241
        %v289 = vpop.xlane.xlu0 %288
        %290 = vadd.xlane.f32.xlu0 %v242
        %v291 = vpop.xlane.xlu0 %290
        %292 = vadd.xlane.f32.xlu0 %v243
        %v293 = vpop.xlane.xlu0 %292
        %294 = vadd.xlane.f32.xlu0 %v244
        %v295 = vpop.xlane.xlu0 %294
        %296 = vadd.xlane.f32.xlu0 %v245
        %v297 = vpop.xlane.xlu0 %296
        %v298 = vrcp.pop 128.0
        %v299 = vmul.f32 %v247, %v298
        %v300 = vmul.f32 %v249, %v298
        %v301 = vmul.f32 %v251, %v298
        %v302 = vmul.f32 %v253, %v298
        %v303 = vmul.f32 %v255, %v298
        %v304 = vmul.f32 %v257, %v298
        %v305 = vmul.f32 %v259, %v298
        %v306 = vmul.f32 %v261, %v298
        %v307 = vmul.f32 %v263, %v298
        %v308 = vmul.f32 %v265, %v298
        %v309 = vmul.f32 %v267, %v298
        %v310 = vmul.f32 %v269, %v298
        %v311 = vmul.f32 %v271, %v298
        %v312 = vmul.f32 %v273, %v298
        %v313 = vmul.f32 %v275, %v298
        %v314 = vmul.f32 %v277, %v298
        %v315 = vmul.f32 %v279, %v298
        %v316 = vmul.f32 %v281, %v298
        %v317 = vmul.f32 %v283, %v298
        %v318 = vmul.f32 %v285, %v298
        %v319 = vmul.f32 %v287, %v298
        %v320 = vmul.f32 %v289, %v298
        %v321 = vmul.f32 %v291, %v298
        %v322 = vmul.f32 %v293, %v298
        %v323 = vmul.f32 %v295, %v298
        %v324 = vmul.f32 %v297, %v298
        %v325 = vsub.f32 %v220, %v299
        %v326 = vsub.f32 %v221, %v300
        %v327 = vsub.f32 %v222, %v301
        %v328 = vsub.f32 %v223, %v302
        %v329 = vsub.f32 %v224, %v303
        %v330 = vsub.f32 %v225, %v304
        %v331 = vsub.f32 %v226, %v305
        %v332 = vsub.f32 %v227, %v306
        %v333 = vsub.f32 %v228, %v307
        %v334 = vsub.f32 %v229, %v308
        %v335 = vsub.f32 %v230, %v309
        %v336 = vsub.f32 %v231, %v310
        %v337 = vsub.f32 %v232, %v311
        %v338 = vsub.f32 %v233, %v312
        %v339 = vsub.f32 %v234, %v313
        %v340 = vsub.f32 %v235, %v314
        %v341 = vsub.f32 %v236, %v315
        %v342 = vsub.f32 %v237, %v316
        %v343 = vsub.f32 %v238, %v317
        %v344 = vsub.f32 %v239, %v318
        %v345 = vsub.f32 %v240, %v319
        %v346 = vsub.f32 %v241, %v320
        %v347 = vsub.f32 %v242, %v321
        %v348 = vsub.f32 %v243, %v322
        %v349 = vsub.f32 %v244, %v323
        %v350 = vsub.f32 %v245, %v324
        %v351 = vmul.f32 %v325, %v325
        %v352 = vmul.f32 %v326, %v326
        %v353 = vmul.f32 %v327, %v327
        %v354 = vmul.f32 %v328, %v328
        %v355 = vmul.f32 %v329, %v329
        %v356 = vmul.f32 %v330, %v330
        %v357 = vmul.f32 %v331, %v331
        %v358 = vmul.f32 %v332, %v332
        %v359 = vmul.f32 %v333, %v333
        %v360 = vmul.f32 %v334, %v334
        %v361 = vmul.f32 %v335, %v335
        %v362 = vmul.f32 %v336, %v336
        %v363 = vmul.f32 %v337, %v337
        %v364 = vmul.f32 %v338, %v338
        %v365 = vmul.f32 %v339, %v339
        %v366 = vmul.f32 %v340, %v340
        %v367 = vmul.f32 %v341, %v341
        %v368 = vmul.f32 %v342, %v342
        %v369 = vmul.f32 %v343, %v343
        %v370 = vmul.f32 %v344, %v344
        %v371 = vmul.f32 %v345, %v345
        %v372 = vmul.f32 %v346, %v346
        %v373 = vmul.f32 %v347, %v347
        %v374 = vmul.f32 %v348, %v348
        %v375 = vmul.f32 %v349, %v349
        %v376 = vmul.f32 %v350, %v350
        %377 = vadd.xlane.f32.xlu0 %v351
        %v378 = vpop.xlane.xlu0 %377
        %379 = vadd.xlane.f32.xlu0 %v352
        %v380 = vpop.xlane.xlu0 %379
        %381 = vadd.xlane.f32.xlu0 %v353
        %v382 = vpop.xlane.xlu0 %381
        %383 = vadd.xlane.f32.xlu0 %v354
        %v384 = vpop.xlane.xlu0 %383
        %385 = vadd.xlane.f32.xlu0 %v355
        %v386 = vpop.xlane.xlu0 %385
        %387 = vadd.xlane.f32.xlu0 %v356
        %v388 = vpop.xlane.xlu0 %387
        %389 = vadd.xlane.f32.xlu0 %v357
        %v390 = vpop.xlane.xlu0 %389
        %391 = vadd.xlane.f32.xlu0 %v358
        %v392 = vpop.xlane.xlu0 %391
        %393 = vadd.xlane.f32.xlu0 %v359
        %v394 = vpop.xlane.xlu0 %393
        %395 = vadd.xlane.f32.xlu0 %v360
        %v396 = vpop.xlane.xlu0 %395
        %397 = vadd.xlane.f32.xlu0 %v361
        %v398 = vpop.xlane.xlu0 %397
        %399 = vadd.xlane.f32.xlu0 %v362
        %v400 = vpop.xlane.xlu0 %399
        %401 = vadd.xlane.f32.xlu0 %v363
        %v402 = vpop.xlane.xlu0 %401
        %403 = vadd.xlane.f32.xlu0 %v364
        %v404 = vpop.xlane.xlu0 %403
        %405 = vadd.xlane.f32.xlu0 %v365
        %v406 = vpop.xlane.xlu0 %405
        %407 = vadd.xlane.f32.xlu0 %v366
        %v408 = vpop.xlane.xlu0 %407
        %409 = vadd.xlane.f32.xlu0 %v367
        %v410 = vpop.xlane.xlu0 %409
        %411 = vadd.xlane.f32.xlu0 %v368
        %v412 = vpop.xlane.xlu0 %411
        %413 = vadd.xlane.f32.xlu0 %v369
        %v414 = vpop.xlane.xlu0 %413
        %415 = vadd.xlane.f32.xlu0 %v370
        %v416 = vpop.xlane.xlu0 %415
        %417 = vadd.xlane.f32.xlu0 %v371
        %v418 = vpop.xlane.xlu0 %417
        %419 = vadd.xlane.f32.xlu0 %v372
        %v420 = vpop.xlane.xlu0 %419
        %421 = vadd.xlane.f32.xlu0 %v373
        %v422 = vpop.xlane.xlu0 %421
        %423 = vadd.xlane.f32.xlu0 %v374
        %v424 = vpop.xlane.xlu0 %423
        %425 = vadd.xlane.f32.xlu0 %v375
        %v426 = vpop.xlane.xlu0 %425
        %427 = vadd.xlane.f32.xlu0 %v376
        %v428 = vpop.xlane.xlu0 %427
        %v429 = vmul.f32 %v378, %v298
        %v430 = vmul.f32 %v380, %v298
        %v431 = vmul.f32 %v382, %v298
        %v432 = vmul.f32 %v384, %v298
        %v433 = vmul.f32 %v386, %v298
        %v434 = vmul.f32 %v388, %v298
        %v435 = vmul.f32 %v390, %v298
        %v436 = vmul.f32 %v392, %v298
        %v437 = vmul.f32 %v394, %v298
        %v438 = vmul.f32 %v396, %v298
        %v439 = vmul.f32 %v398, %v298
        %v440 = vmul.f32 %v400, %v298
        %v441 = vmul.f32 %v402, %v298
        %v442 = vmul.f32 %v404, %v298
        %v443 = vmul.f32 %v406, %v298
        %v444 = vmul.f32 %v408, %v298
        %v445 = vmul.f32 %v410, %v298
        %v446 = vmul.f32 %v412, %v298
        %v447 = vmul.f32 %v414, %v298
        %v448 = vmul.f32 %v416, %v298
        %v449 = vmul.f32 %v418, %v298
        %v450 = vmul.f32 %v420, %v298
        %v451 = vmul.f32 %v422, %v298
        %v452 = vmul.f32 %v424, %v298
        %v453 = vmul.f32 %v426, %v298
        %v454 = vmul.f32 %v428, %v298
        %v455 = vadd.f32 %v429, 1e-05
        %v456 = vadd.f32 %v430, 1e-05
        %v457 = vadd.f32 %v431, 1e-05
        %v458 = vadd.f32 %v432, 1e-05
        %v459 = vadd.f32 %v433, 1e-05
        %v460 = vadd.f32 %v434, 1e-05
        %v461 = vadd.f32 %v435, 1e-05
        %v462 = vadd.f32 %v436, 1e-05
        %v463 = vadd.f32 %v437, 1e-05
        %v464 = vadd.f32 %v438, 1e-05
        %v465 = vadd.f32 %v439, 1e-05
        %v466 = vadd.f32 %v440, 1e-05
        %v467 = vadd.f32 %v441, 1e-05
        %v468 = vadd.f32 %v442, 1e-05
        %v469 = vadd.f32 %v443, 1e-05
        %v470 = vadd.f32 %v444, 1e-05
        %v471 = vadd.f32 %v445, 1e-05
        %v472 = vadd.f32 %v446, 1e-05
        %v473 = vadd.f32 %v447, 1e-05
        %v474 = vadd.f32 %v448, 1e-05
        %v475 = vadd.f32 %v449, 1e-05
        %v476 = vadd.f32 %v450, 1e-05
        %v477 = vadd.f32 %v451, 1e-05
        %v478 = vadd.f32 %v452, 1e-05
        %v479 = vadd.f32 %v453, 1e-05
        %v480 = vadd.f32 %v454, 1e-05
        %v481 = vrsqrt.pop %v455
        %v482 = vrsqrt.pop %v456
        %v483 = vrsqrt.pop %v457
        %v484 = vrsqrt.pop %v458
        %v485 = vrsqrt.pop %v459
        %v486 = vrsqrt.pop %v460
        %v487 = vrsqrt.pop %v461
        %v488 = vrsqrt.pop %v462
        %v489 = vrsqrt.pop %v463
        %v490 = vrsqrt.pop %v464
        %v491 = vrsqrt.pop %v465
        %v492 = vrsqrt.pop %v466
        %v493 = vrsqrt.pop %v467
        %v494 = vrsqrt.pop %v468
        %v495 = vrsqrt.pop %v469
        %v496 = vrsqrt.pop %v470
        %v497 = vrsqrt.pop %v471
        %v498 = vrsqrt.pop %v472
        %v499 = vrsqrt.pop %v473
        %v500 = vrsqrt.pop %v474
        %v501 = vrsqrt.pop %v475
        %v502 = vrsqrt.pop %v476
        %v503 = vrsqrt.pop %v477
        %v504 = vrsqrt.pop %v478
        %v505 = vrsqrt.pop %v479
        %v506 = vrsqrt.pop %v480
        %v507 = vmul.f32 %v325, %v481
        %v508 = vmul.f32 %v326, %v482
        %v509 = vmul.f32 %v327, %v483
        %v510 = vmul.f32 %v328, %v484
        %v511 = vmul.f32 %v329, %v485
        %v512 = vmul.f32 %v330, %v486
        %v513 = vmul.f32 %v331, %v487
        %v514 = vmul.f32 %v332, %v488
        %v515 = vmul.f32 %v333, %v489
        %v516 = vmul.f32 %v334, %v490
        %v517 = vmul.f32 %v335, %v491
        %v518 = vmul.f32 %v336, %v492
        %v519 = vmul.f32 %v337, %v493
        %v520 = vmul.f32 %v338, %v494
        %v521 = vmul.f32 %v339, %v495
        %v522 = vmul.f32 %v340, %v496
        %v523 = vmul.f32 %v341, %v497
        %v524 = vmul.f32 %v342, %v498
        %v525 = vmul.f32 %v343, %v499
        %v526 = vmul.f32 %v344, %v500
        %v527 = vmul.f32 %v345, %v501
        %v528 = vmul.f32 %v346, %v502
        %v529 = vmul.f32 %v347, %v503
        %v530 = vmul.f32 %v348, %v504
        %v531 = vmul.f32 %v349, %v505
        %v532 = vmul.f32 %v350, %v506
        %v533 = vld [vmem:[#allocation5] sm:$0xff]
        %v534 = vld [vmem:[#allocation5 + $0x8] sm:$0xff]
        %v535 = vld [vmem:[#allocation5 + $0x10] sm:$0xff]
        %v536 = vld [vmem:[#allocation5 + $0x18] sm:$0xff]
        %v537 = vld [vmem:[#allocation5 + $0x20] sm:$0xff]
        %v538 = vld [vmem:[#allocation5 + $0x28] sm:$0xff]
        %v539 = vld [vmem:[#allocation5 + $0x30] sm:$0xff]
        %v540 = vld [vmem:[#allocation5 + $0x38] sm:$0xff]
        %v541 = vld [vmem:[#allocation5 + $0x40] sm:$0xff]
        %v542 = vld [vmem:[#allocation5 + $0x48] sm:$0xff]
        %v543 = vld [vmem:[#allocation5 + $0x50] sm:$0xff]
        %v544 = vld [vmem:[#allocation5 + $0x58] sm:$0xff]
        %v545 = vld [vmem:[#allocation5 + $0x60] sm:$0xff]
        %v546 = vld [vmem:[#allocation5 + $0x68] sm:$0xff]
        %v547 = vld [vmem:[#allocation5 + $0x70] sm:$0xff]
        %v548 = vld [vmem:[#allocation5 + $0x78] sm:$0xff]
        %v549 = vld [vmem:[%s2] sm:$0x1]
        %v551 = vlaneseq
        %v552 = vshrl.u32 %v551, 7
        %v553 = vsub.s32 0, %v552
        %v554 = vrot.slane %v549, %v553
        %556 = vmatprep.subr.mxu0 0.0
        %557 = vmatpush1.msra.mxu0 %v533
        %558 = vmatprep.subr.mxu0 0.0
        %559 = vmatpush1.msra.mxu0 %v534
        %560 = vmatprep.subr.mxu0 0.0
        %561 = vmatpush1.msra.mxu0 %v535
        %562 = vmatprep.subr.mxu0 0.0
        %563 = vmatpush1.msra.mxu0 %v536
        %564 = vmatprep.subr.mxu0 0.0
        %565 = vmatpush1.msra.mxu0 %v537
        %566 = vmatprep.subr.mxu0 0.0
        %567 = vmatpush1.msra.mxu0 %v538
        %568 = vmatprep.subr.mxu0 0.0
        %569 = vmatpush1.msra.mxu0 %v539
        %570 = vmatprep.subr.mxu0 0.0
        %571 = vmatpush1.msra.mxu0 %v540
        %572 = vmatprep.subr.mxu0 0.0
        %573 = vmatpush1.msra.mxu0 %v541
        %574 = vmatprep.subr.mxu0 0.0
        %575 = vmatpush1.msra.mxu0 %v542
        %576 = vmatprep.subr.mxu0 0.0
        %577 = vmatpush1.msra.mxu0 %v543
        %578 = vmatprep.subr.mxu0 0.0
        %579 = vmatpush1.msra.mxu0 %v544
        %580 = vmatprep.subr.mxu0 0.0
        %581 = vmatpush1.msra.mxu0 %v545
        %582 = vmatprep.subr.mxu0 0.0
        %583 = vmatpush1.msra.mxu0 %v546
        %584 = vmatprep.subr.mxu0 0.0
        %585 = vmatpush1.msra.mxu0 %v547
        %586 = vmatprep.subr.mxu0 0.0
        %587 = vmatpush1.msra.mxu0 %v548
        %588 = vmatprep.subr.mxu0 0.0
        %589 = vmatpush1.msra.mxu0 0.0
        %590 = vmatprep.subr.mxu0 0.0
        %591 = vmatpush1.msra.mxu0 0.0
        %592 = vmatprep.subr.mxu0 0.0
        %593 = vmatpush1.msra.mxu0 0.0
        %594 = vmatprep.subr.mxu0 0.0
        %595 = vmatpush1.msra.mxu0 0.0
        %596 = vmatprep.subr.mxu0 0.0
        %597 = vmatpush1.msra.mxu0 0.0
        %598 = vmatprep.subr.mxu0 0.0
        %599 = vmatpush1.msra.mxu0 0.0
        %600 = vmatprep.subr.mxu0 0.0
        %601 = vmatpush1.msra.mxu0 0.0
        %602 = vmatprep.subr.mxu0 0.0
        %603 = vmatpush1.msra.mxu0 0.0
        %604 = vmatprep.subr.mxu0 0.0
        %605 = vmatpush1.msra.mxu0 0.0
        %606 = vmatprep.subr.mxu0 0.0
        %607 = vmatpush1.msra.mxu0 0.0
        %608 = vmatprep.subr.mxu0 0.0
        %609 = vmatpush1.msra.mxu0 0.0
        %610 = vmatprep.subr.mxu0 0.0
        %611 = vmatpush1.msra.mxu0 0.0
        %612 = vmatprep.subr.mxu0 0.0
        %613 = vmatpush1.msra.mxu0 0.0
        %614 = vmatprep.subr.mxu0 0.0
        %615 = vmatpush1.msra.mxu0 0.0
        %616 = vmatprep.subr.mxu0 0.0
        %617 = vmatpush1.msra.mxu0 0.0
        %618 = vmatprep.subr.mxu0 0.0
        %619 = vmatpush1.msra.mxu0 0.0
        %620 = vmatprep.mubr.f32.mxu0 0.0
        %621 = vmatmul.mubr.f32.gmra.mrb[0].mxu0 %v507
        %v622 = vpop.f32.mrb[0].mxu0
        %v623 = vadd.f32 %v554, %v622
        %v624 = vpop.f32.mrb[0].mxu0
        %625 = vmatprep.mubr.f32.mxu0 0.0
        %626 = vmatmul.mubr.f32.gmra.mrb[0].mxu0 %v508
        %v627 = vpop.f32.mrb[0].mxu0
        %v628 = vadd.f32 %v554, %v627
        %v629 = vpop.f32.mrb[0].mxu0
        %630 = vmatprep.mubr.f32.mxu0 0.0
        %631 = vmatmul.mubr.f32.gmra.mrb[0].mxu0 %v509
        %v632 = vpop.f32.mrb[0].mxu0
        %v633 = vadd.f32 %v554, %v632
        %v634 = vpop.f32.mrb[0].mxu0
        %635 = vmatprep.mubr.f32.mxu0 0.0
        %636 = vmatmul.mubr.f32.gmra.mrb[0].mxu0 %v510
        %v637 = vpop.f32.mrb[0].mxu0
        %v638 = vadd.f32 %v554, %v637
        %v639 = vpop.f32.mrb[0].mxu0
        %640 = vmatprep.mubr.f32.mxu0 0.0
        %641 = vmatmul.mubr.f32.gmra.mrb[0].mxu0 %v511
        %v642 = vpop.f32.mrb[0].mxu0
        %v643 = vadd.f32 %v554, %v642
        %v644 = vpop.f32.mrb[0].mxu0
        %645 = vmatprep.mubr.f32.mxu0 0.0
        %646 = vmatmul.mubr.f32.gmra.mrb[0].mxu0 %v512
        %v647 = vpop.f32.mrb[0].mxu0
        %v648 = vadd.f32 %v554, %v647
        %v649 = vpop.f32.mrb[0].mxu0
        %650 = vmatprep.mubr.f32.mxu0 0.0
        %651 = vmatmul.mubr.f32.gmra.mrb[0].mxu0 %v513
        %v652 = vpop.f32.mrb[0].mxu0
        %v653 = vadd.f32 %v554, %v652
        %v654 = vpop.f32.mrb[0].mxu0
        %655 = vmatprep.mubr.f32.mxu0 0.0
        %656 = vmatmul.mubr.f32.gmra.mrb[0].mxu0 %v514
        %v657 = vpop.f32.mrb[0].mxu0
        %v658 = vadd.f32 %v554, %v657
        %v659 = vpop.f32.mrb[0].mxu0
        %660 = vmatprep.mubr.f32.mxu0 0.0
        %661 = vmatmul.mubr.f32.gmra.mrb[0].mxu0 %v515
        %v662 = vpop.f32.mrb[0].mxu0
        %v663 = vadd.f32 %v554, %v662
        %v664 = vpop.f32.mrb[0].mxu0
        %665 = vmatprep.mubr.f32.mxu0 0.0
        %666 = vmatmul.mubr.f32.gmra.mrb[0].mxu0 %v516
        %v667 = vpop.f32.mrb[0].mxu0
        %v668 = vadd.f32 %v554, %v667
        %v669 = vpop.f32.mrb[0].mxu0
        %670 = vmatprep.mubr.f32.mxu0 0.0
        %671 = vmatmul.mubr.f32.gmra.mrb[0].mxu0 %v517
        %v672 = vpop.f32.mrb[0].mxu0
        %v673 = vadd.f32 %v554, %v672
        %v674 = vpop.f32.mrb[0].mxu0
        %675 = vmatprep.mubr.f32.mxu0 0.0
        %676 = vmatmul.mubr.f32.gmra.mrb[0].mxu0 %v518
        %v677 = vpop.f32.mrb[0].mxu0
        %v678 = vadd.f32 %v554, %v677
        %v679 = vpop.f32.mrb[0].mxu0
        %680 = vmatprep.mubr.f32.mxu0 0.0
        %681 = vmatmul.mubr.f32.gmra.mrb[0].mxu0 %v519
        %v682 = vpop.f32.mrb[0].mxu0
        %v683 = vadd.f32 %v554, %v682
        %v684 = vpop.f32.mrb[0].mxu0
        %685 = vmatprep.mubr.f32.mxu0 0.0
        %686 = vmatmul.mubr.f32.gmra.mrb[0].mxu0 %v520
        %v687 = vpop.f32.mrb[0].mxu0
        %v688 = vadd.f32 %v554, %v687
        %v689 = vpop.f32.mrb[0].mxu0
        %690 = vmatprep.mubr.f32.mxu0 0.0
        %691 = vmatmul.mubr.f32.gmra.mrb[0].mxu0 %v521
        %v692 = vpop.f32.mrb[0].mxu0
        %v693 = vadd.f32 %v554, %v692
        %v694 = vpop.f32.mrb[0].mxu0
        %695 = vmatprep.mubr.f32.mxu0 0.0
        %696 = vmatmul.mubr.f32.gmra.mrb[0].mxu0 %v522
        %v697 = vpop.f32.mrb[0].mxu0
        %v698 = vadd.f32 %v554, %v697
        %v699 = vpop.f32.mrb[0].mxu0
        %700 = vmatprep.mubr.f32.mxu0 0.0
        %701 = vmatmul.mubr.f32.gmra.mrb[0].mxu0 %v523
        %v702 = vpop.f32.mrb[0].mxu0
        %v703 = vadd.f32 %v554, %v702
        %v704 = vpop.f32.mrb[0].mxu0
        %705 = vmatprep.mubr.f32.mxu0 0.0
        %706 = vmatmul.mubr.f32.gmra.mrb[0].mxu0 %v524
        %v707 = vpop.f32.mrb[0].mxu0
        %v708 = vadd.f32 %v554, %v707
        %v709 = vpop.f32.mrb[0].mxu0
        %710 = vmatprep.mubr.f32.mxu0 0.0
        %711 = vmatmul.mubr.f32.gmra.mrb[0].mxu0 %v525
        %v712 = vpop.f32.mrb[0].mxu0
        %v713 = vadd.f32 %v554, %v712
        %v714 = vpop.f32.mrb[0].mxu0
        %715 = vmatprep.mubr.f32.mxu0 0.0
        %716 = vmatmul.mubr.f32.gmra.mrb[0].mxu0 %v526
        %v717 = vpop.f32.mrb[0].mxu0
        %v718 = vadd.f32 %v554, %v717
        %v719 = vpop.f32.mrb[0].mxu0
        %720 = vmatprep.mubr.f32.mxu0 0.0
        %721 = vmatmul.mubr.f32.gmra.mrb[0].mxu0 %v527
        %v722 = vpop.f32.mrb[0].mxu0
        %v723 = vadd.f32 %v554, %v722
        %v724 = vpop.f32.mrb[0].mxu0
        %725 = vmatprep.mubr.f32.mxu0 0.0
        %726 = vmatmul.mubr.f32.gmra.mrb[0].mxu0 %v528
        %v727 = vpop.f32.mrb[0].mxu0
        %v728 = vadd.f32 %v554, %v727
        %v729 = vpop.f32.mrb[0].mxu0
        %730 = vmatprep.mubr.f32.mxu0 0.0
        %731 = vmatmul.mubr.f32.gmra.mrb[0].mxu0 %v529
        %v732 = vpop.f32.mrb[0].mxu0
        %v733 = vadd.f32 %v554, %v732
        %v734 = vpop.f32.mrb[0].mxu0
        %735 = vmatprep.mubr.f32.mxu0 0.0
        %736 = vmatmul.mubr.f32.gmra.mrb[0].mxu0 %v530
        %v737 = vpop.f32.mrb[0].mxu0
        %v738 = vadd.f32 %v554, %v737
        %v739 = vpop.f32.mrb[0].mxu0
        %740 = vmatprep.mubr.f32.mxu0 0.0
        %741 = vmatmul.mubr.f32.gmra.mrb[0].mxu0 %v531
        %v742 = vpop.f32.mrb[0].mxu0
        %v743 = vadd.f32 %v554, %v742
        %v744 = vpop.f32.mrb[0].mxu0
        %745 = vmatprep.mubr.f32.mxu0 0.0
        %746 = vmatmul.mubr.f32.gmra.mrb[0].mxu0 %v532
        %v747 = vpop.f32.mrb[0].mxu0
        %v748 = vadd.f32 %v554, %v747
        %v749 = vpop.f32.mrb[0].mxu0
        %750 = vdwg.mxu0
        %751 = vst [vmem:[%s209] sm:$0xff] %v623
        %752 = vst [vmem:[%s209 + $0x8] sm:$0xff] %v628
        %753 = vst [vmem:[%s209 + $0x10] sm:$0xff] %v633
        %754 = vst [vmem:[%s209 + $0x18] sm:$0xff] %v638
        %755 = vst [vmem:[%s209 + $0x20] sm:$0xff] %v643
        %756 = vst [vmem:[%s209 + $0x28] sm:$0xff] %v648
        %757 = vst [vmem:[%s209 + $0x30] sm:$0xff] %v653
        %758 = vst [vmem:[%s209 + $0x38] sm:$0xff] %v658
        %759 = vst [vmem:[%s209 + $0x40] sm:$0xff] %v663
        %760 = vst [vmem:[%s209 + $0x48] sm:$0xff] %v668
        %761 = vst [vmem:[%s209 + $0x50] sm:$0xff] %v673
        %762 = vst [vmem:[%s209 + $0x58] sm:$0xff] %v678
        %763 = vst [vmem:[%s209 + $0x60] sm:$0xff] %v683
        %764 = vst [vmem:[%s209 + $0x68] sm:$0xff] %v688
        %765 = vst [vmem:[%s209 + $0x70] sm:$0xff] %v693
        %766 = vst [vmem:[%s209 + $0x78] sm:$0xff] %v698
        %767 = vst [vmem:[%s209 + $0x80] sm:$0xff] %v703
        %768 = vst [vmem:[%s209 + $0x88] sm:$0xff] %v708
        %769 = vst [vmem:[%s209 + $0x90] sm:$0xff] %v713
        %770 = vst [vmem:[%s209 + $0x98] sm:$0xff] %v718
        %771 = vst [vmem:[%s209 + $0xa0] sm:$0xff] %v723
        %772 = vst [vmem:[%s209 + $0xa8] sm:$0xff] %v728
        %773 = vst [vmem:[%s209 + $0xb0] sm:$0xff] %v733
        %774 = vst [vmem:[%s209 + $0xb8] sm:$0xff] %v738
        %775 = vst [vmem:[%s209 + $0xc0] sm:$0xff] %v743
        %776 = vst [vmem:[%s209 + $0xc8] sm:$0xff] %v748
        %s777 = sand.u32 %s97, 1
        %s778 = scalar_lea.sflag [#allocation4], %s777
        %s779 = sand.u32 %s97, 1
        %s780 = smul.addr %s779, 208
        %s781 = scalar_lea.vmem [#allocation7], %s780
        // Predicated region
        $region41: #{tpu_custom_call.1} parent=31 // pred_check
          %p782 = pneg %p107
        $region42: #{tpu_custom_call.1} parent=31 // pred_check_branch
          %784 = sbr.rel (%p782) target = $region44
        $region43: #{tpu_custom_call.1} parent=31 // pred_region
          %s785 = smul.u32 26, %s21
          %s786 = ssub.s32 50, %s785
          %p787 = scmp.lt.s32.totalorder %s786, 26
          %s788 = scalar_select %p787, %s786, 26
          %s789 = smul.u32 128, %s788
          %s791 = ssub.s32 3328, %s789
          %792 = vsyncadd %s778, %s791
          %p793 = scmp.ne.s32.totalorder 0, %s789
          %s794 = smul.addr %s785, 128
          %s795 = scalar_lea.hbm %s3, %s794
          %s796 = smul.u32 8, %s788
          %s797 = sshll.u32 %s781, 4
          %s798 = int_to_ptr.vmem [resolvable:$true] %s797
          %s799 = sshll.u32 %s796, 4
          %803 = dma.vmem_to_hbm [thread:$0]  (%p793), %s798, %s799, %s795, %s778, 128, 128, 8
        $region44: #{tpu_custom_call.1} parent=31 // pred_fallthru
          _
      $region32: #{tpu_custom_call.1} parent=5 // pred_fallthru
        _
      %p804 = scmp.le.s32.totalorder 2, %s16
      // Predicated region
      $region45: #{tpu_custom_call.1} parent=5 // pred_check
        %p805 = pneg %p804
      $region46: #{tpu_custom_call.1} parent=5 // pred_check_branch
        %807 = sbr.rel (%p805) target = $region48
      $region47: #{tpu_custom_call.1} parent=5 // pred_region
        %s808 = ssub.s32 %s16, 2
        // Predicated region
        $region49: #{tpu_custom_call.1} parent=47 // pred_check
          %p809 = pneg %p113
        $region50: #{tpu_custom_call.1} parent=47 // pred_check_branch
          %811 = sbr.rel (%p809) target = $region52
        $region51: #{tpu_custom_call.1} parent=47 // pred_region
          %s812 = sand.u32 %s98, 1
          %s813 = scalar_lea.sflag [#allocation4], %s812
          %s814 = sand.u32 %s98, 1
          %s815 = smul.addr %s814, 208
          %s816 = scalar_lea.vmem [#allocation7], %s815
          %817 = dma.done %s813, 3328
        $region52: #{tpu_custom_call.1} parent=47 // pred_fallthru
          _
      $region48: #{tpu_custom_call.1} parent=5 // pred_fallthru
        _
    $region6: #{tpu_custom_call.1} parent=1 // loop_footer
      %s20 = sadd.s32 1, %s16
    $region7: #{tpu_custom_call.1} parent=1 // loop_footer_branch
      %15 = sbr.rel target = $region3
    $region8: #{tpu_custom_call.1} parent=1 // loop_exit
      _
    %818 = vsyncpa [#allocation3], 1
    %s819 = scalar_lea.sflag [#allocation3], 1
    %820 = vsyncpa %s819, 1
    %821 = vsyncpa [#allocation6], 1
    %822 = vsyncpa [#allocation4], 1
    %s823 = scalar_lea.sflag [#allocation4], 1
    %824 = vsyncpa %s823, 1

</llo_original>
